<compile_context>
chip_gen: v7x
topology: tpu7x:2x2x1
jax: 0.10.0
libtpu: 0.0.40
codegen_flags: <defaults>
</compile_context>

<pallas_src>
import jax
import jax.numpy as jnp
from jax.experimental import pallas as pl
from jax.experimental.pallas import tpu as pltpu

F32 = jnp.float32

M = 4        # rows of the flattened (H, 10) input slab
N_OUT = 3    # output features


def _gelu_tanh(v):
    # F.gelu(..., approximate=True) == tanh approximation
    c = 0.7978845608028654  # sqrt(2/pi)
    return 0.5 * v * (1.0 + jnp.tanh(c * (v + 0.044715 * v * v * v)))


def _vpu_matmul(a, w):
    """(m,k)@(k,n) with tiny k, unrolled on the VPU (broadcast-mult + add)."""
    k = a.shape[1]
    acc = a[:, 0:1] * w[0:1, :]
    for i in range(1, k):
        acc = acc + a[:, i:i + 1] * w[i:i + 1, :]
    return acc


def fused_kernel(x_ref, r_ref, w_ref, o_ref):
    x = x_ref[0, 0]                          # (4, 10), squeeze NCHW in-kernel

    # ---------------- randoms (generated in the jitted wrapper) ----------------
    n1 = r_ref[0:M, 0:3]       # randn_like for a1   TODO(synk): original reads a1 before assignment
    n2 = r_ref[0:M, 3:6]       # randn_like for a2
    u1 = r_ref[0:M, 6:9]       # rand_like(conv(x)) term
    u2 = r_ref[0:M, 9:12]      # rand_like for a2
    ud = r_ref[0:M, 12:24]     # (4,12) uniforms for the 4 dropout masks

    # single fused compare/select for all four inverted-dropout keep masks
    col = jax.lax.broadcasted_iota(jnp.int32, (M, 12), 1)
    is_p5 = jnp.logical_and(col >= 6, col < 9)          # cols 6:9 -> p=0.5
    keep = jnp.where(is_p5, 0.5, 0.7)
    scale = jnp.where(is_p5, 2.0, 1.0 / 0.7)
    masks = jnp.where(ud < keep, scale, 0.0)             # (4, 12)
    ma = masks[:, 0:3]    # dropout(linear_1(x), p=0.3)
    mb = masks[:, 3:6]    # F.dropout(a2, p=0.3)
    mc = masks[:, 6:9]    # inner F.dropout(a2), default p=0.5
    md = masks[:, 9:12]   # outer dropout, p=0.3

    # ---------------- packed constant weights ----------------
    Wbig = w_ref[0:10, 0:6]      # [Wl^T | pad(W1^T)]            (10, 6)
    bbig = w_ref[10:11, 0:6]     # [bl | b1]                     (1, 6)
    wlT  = w_ref[0:10, 0:3]      # Wl^T                          (10, 3)
    bl   = w_ref[10:11, 0:3]     # (1, 3)
    wl3T = w_ref[0:3, 6:9]       # TODO(synk): self.linear(a1) is shape-invalid; 3x3 slice of Wl^T
    w1s  = w_ref[3:6, 6:9]       # sum of the three 3x3 blocks of W1^T
    wcT  = w_ref[6:10, 6:9]      # conv weight reshaped^T        (4, 3)
    bc   = w_ref[10:11, 6:9]     # conv bias                     (1, 3)

    # ---- linear(x) & linear_1(x) in one unrolled VPU pass (no MXU, no tanh) ----
    r6 = _vpu_matmul(x, Wbig) + bbig                     # (4, 6)
    lin_x = r6[:, 0:3]                                   # linear(x)
    lin1_x = r6[:, 3:6]                                  # linear_1(x[..., :9])  TODO(synk): linear_1 expects 9 features

    # ---- tanh branch, off the x-branch critical path ----
    tx = jnp.tanh(x)                                     # (4, 10), single EUP pass, reused
    lin_tanh_x = _vpu_matmul(tx, wlT) + bl               # linear(tanh(x))

    # ---- conv lowered to per-channel spatial mean (im2col means in-kernel) ----
    # TODO(synk): conv(x) (N,3,H',W') can never broadcast with linear(x) (...,3);
    # we reduce the conv output over space to a per-channel row.
    pm0 = jnp.mean(x[0:3, 0:9])
    pm1 = jnp.mean(x[0:3, 1:10])
    pm2 = jnp.mean(x[1:4, 0:9])
    pm3 = jnp.mean(x[1:4, 1:10])
    conv_b = (bc + pm0 * wcT[0:1, :] + pm1 * wcT[1:2, :]
                 + pm2 * wcT[2:3, :] + pm3 * wcT[3:4, :])          # (1, 3)

    # a1 = linear(x) + randn + conv(x) + rand + gelu(linear(x)) + dropout(linear_1(x))
    a1 = lin_x + n1 + conv_b + u1 + _gelu_tanh(lin_x) + ma * lin1_x
    a2 = u2 + n2

    lin_a1 = _vpu_matmul(a1, wl3T) + bl
    # F.linear(a2, tanh(x)): TODO(synk): shape-invalid in the original; use the
    # 3x3 slice tanh(x[:3,:3]) as the weight -> a2 @ tanh(x3)^T (contract on dim 1).
    flin_a2 = jax.lax.dot_general(a2, tx[0:3, 0:3],
                                  (((1,), (1,)), ((), ())),
                                  preferred_element_type=F32)
    # linear_1(x - a2): TODO(synk): (.,10) vs (.,3) don't broadcast in the original;
    # interpreted as linear_1(x[..., :9] - tile(a2, 3)).
    lin1_xm = lin1_x - _vpu_matmul(a2, w1s)

    # TODO(synk): original unsqueezes linear(tanh(x)) to rank 5; kept rank-consistent here.
    inner = -a1 + lin_tanh_x + lin1_xm

    out = (a1 * a2
           + (mb * a2) * (lin_a1 + flin_a2)
           + jnp.tanh(conv_b)
           + md * ((mc * a2) * inner))
    o_ref[...] = out


def prep_params(params):
    """One-time packing of all constant weights into a single (16,16) slab."""
    Wl, bl, W1, b1, Wc, bc = params
    wlT = Wl.T                                               # (10, 3)
    w1T = W1.T                                               # (9, 3)
    w1T_pad = jnp.concatenate([w1T, jnp.zeros((1, 3), F32)], axis=0)   # (10, 3)
    Wbig = jnp.concatenate([wlT, w1T_pad], axis=1)           # (10, 6)
    bbig = jnp.concatenate([bl, b1])                         # (6,)
    wl3T = Wl[:, :3].T                                       # (3, 3)
    w1s = w1T[0:3] + w1T[3:6] + w1T[6:9]                     # (3, 3)
    wcT = Wc.reshape(3, 4).T                                 # (4, 3)

    slab = jnp.zeros((16, 16), F32)
    slab = slab.at[0:10, 0:6].set(Wbig)
    slab = slab.at[10, 0:6].set(bbig)
    slab = slab.at[0:3, 6:9].set(wl3T)
    slab = slab.at[3:6, 6:9].set(w1s)
    slab = slab.at[6:10, 6:9].set(wcT)
    slab = slab.at[10, 6:9].set(bc)
    return slab


def _forward_impl(x, wslab, key):
    """x: (1, 1, 4, 10) f32 NCHW.  Returns (1, 1, 4, 3)."""
    # All randomness for the forward pass, in one small slab (no TPU-only
    # stateful PRNG so the kernel also runs under CPU interpret mode).
    kn, ku = jax.random.split(key)
    nrm = jax.random.normal(kn, (M, 6), F32)                 # n1 | n2
    unif = jax.random.uniform(ku, (M, 18), F32)              # u1 | u2 | 4 dropout
    rslab = jnp.concatenate([nrm, unif], axis=1)             # (4, 24)

    vmem = pl.BlockSpec(memory_space=pltpu.MemorySpace.VMEM)
    out2d = pl.pallas_call(
        fused_kernel,
        out_shape=jax.ShapeDtypeStruct((M, N_OUT), F32),
        in_specs=[vmem, vmem, vmem],
        out_specs=vmem,
        cost_estimate=pl.CostEstimate(flops=2000, transcendentals=64,
                                      bytes_accessed=2048),
    )(x, rslab, wslab)
    return out2d.reshape(1, 1, M, N_OUT)


forward = jax.jit(_forward_impl)


def init_params(key):
    ks = jax.random.split(key, 6)
    Wl = jax.random.normal(ks[0], (3, 10), F32) * 0.3        # nn.Linear(10 -> 3)
    bl = jax.random.normal(ks[1], (3,), F32) * 0.1
    W1 = jax.random.normal(ks[2], (3, 9), F32) * 0.3         # nn.Linear(9 -> 3)
    b1 = jax.random.normal(ks[3], (3,), F32) * 0.1
    Wc = jax.random.normal(ks[4], (3, 1, 2, 2), F32) * 0.3   # Conv2d(1 -> 3, k=2)
    bc = jax.random.normal(ks[5], (3,), F32) * 0.1
    return (Wl, bl, W1, b1, Wc, bc)


if __name__ == "__main__":
    root = jax.random.PRNGKey(0)
    k_param, k_x, k_noise = jax.random.split(root, 3)
    params = init_params(k_param)
    wslab = prep_params(params)                              # hoisted, one-time
    # H must be >= 2 so the 2x2 conv is valid (original x had H=1, which breaks conv).
    x = jax.random.normal(k_x, (1, 1, 4, 10), F32)

    out = forward(x, wslab, k_noise)
    jax.block_until_ready(out)
    assert out.shape == (1, 1, 4, 3) and out.dtype == F32
    assert bool(jnp.all(jnp.isfinite(out)))
    print("KERNEL_OK")
</pallas_src>

<mosaic_0001>
module attributes {stable_mosaic.version = 11 : i64} {
  func.func @fused_kernel(%arg0: memref<1x1x4x10xf32, #tpu.memory_space<vmem>>, %arg1: memref<4x24xf32, #tpu.memory_space<vmem>>, %arg2: memref<16x16xf32, #tpu.memory_space<vmem>>, %arg3: memref<4x3xf32, #tpu.memory_space<vmem>>) attributes {dimension_semantics = [], scalar_prefetch = 0 : i64, scratch_operands = 0 : i64, tpu.core_type = #tpu.core_type<tc>} {
    %c0 = arith.constant 0 : index
    %c0_0 = arith.constant 0 : index
    %c0_1 = arith.constant 0 : index
    %c0_2 = arith.constant 0 : index
    %0 = vector.load %arg0[%c0, %c0_0, %c0_1, %c0_2] : memref<1x1x4x10xf32, #tpu.memory_space<vmem>>, vector<1x1x4x10xf32>
    %1 = vector.shape_cast %0 : vector<1x1x4x10xf32> to vector<4x10xf32>
    %c0_3 = arith.constant 0 : index
    %c0_4 = arith.constant 0 : index
    %2 = vector.load %arg1[%c0_3, %c0_4] : memref<4x24xf32, #tpu.memory_space<vmem>>, vector<4x3xf32>
    %c0_5 = arith.constant 0 : index
    %c3 = arith.constant 3 : index
    %3 = vector.load %arg1[%c0_5, %c3] : memref<4x24xf32, #tpu.memory_space<vmem>>, vector<4x3xf32>
    %c0_6 = arith.constant 0 : index
    %c6 = arith.constant 6 : index
    %4 = vector.load %arg1[%c0_6, %c6] : memref<4x24xf32, #tpu.memory_space<vmem>>, vector<4x3xf32>
    %c0_7 = arith.constant 0 : index
    %c9 = arith.constant 9 : index
    %5 = vector.load %arg1[%c0_7, %c9] : memref<4x24xf32, #tpu.memory_space<vmem>>, vector<4x3xf32>
    %c0_8 = arith.constant 0 : index
    %c12 = arith.constant 12 : index
    %6 = vector.load %arg1[%c0_8, %c12] : memref<4x24xf32, #tpu.memory_space<vmem>>, vector<4x12xf32>
    %7 = tpu.iota {dimensions = array<i32: 1>} : vector<4x12xi32>
    %c6_i32 = arith.constant 6 : i32
    %8 = vector.broadcast %c6_i32 : i32 to vector<4x12xi32>
    %9 = arith.cmpi sge, %7, %8 : vector<4x12xi32>
    %c9_i32 = arith.constant 9 : i32
    %10 = vector.broadcast %c9_i32 : i32 to vector<4x12xi32>
    %11 = arith.cmpi slt, %7, %10 : vector<4x12xi32>
    %12 = arith.andi %9, %11 : vector<4x12xi1>
    %cst = arith.constant 5.000000e-01 : f32
    %cst_9 = arith.constant 0.699999988 : f32
    %13 = vector.broadcast %cst : f32 to vector<4x12xf32>
    %14 = vector.broadcast %cst_9 : f32 to vector<4x12xf32>
    %15 = arith.select %12, %13, %14 : vector<4x12xi1>, vector<4x12xf32>
    %cst_10 = arith.constant 2.000000e+00 : f32
    %cst_11 = arith.constant 1.42857146 : f32
    %16 = vector.broadcast %cst_10 : f32 to vector<4x12xf32>
    %17 = vector.broadcast %cst_11 : f32 to vector<4x12xf32>
    %18 = arith.select %12, %16, %17 : vector<4x12xi1>, vector<4x12xf32>
    %19 = arith.cmpf olt, %6, %15 : vector<4x12xf32>
    %cst_12 = arith.constant 0.000000e+00 : f32
    %20 = vector.broadcast %cst_12 : f32 to vector<4x12xf32>
    %21 = arith.select %19, %18, %20 : vector<4x12xi1>, vector<4x12xf32>
    %22 = vector.extract_strided_slice %21 {offsets = [0, 0], sizes = [4, 3], strides = [1, 1]} : vector<4x12xf32> to vector<4x3xf32>
    %23 = vector.extract_strided_slice %21 {offsets = [0, 3], sizes = [4, 3], strides = [1, 1]} : vector<4x12xf32> to vector<4x3xf32>
    %24 = vector.extract_strided_slice %21 {offsets = [0, 6], sizes = [4, 3], strides = [1, 1]} : vector<4x12xf32> to vector<4x3xf32>
    %25 = vector.extract_strided_slice %21 {offsets = [0, 9], sizes = [4, 3], strides = [1, 1]} : vector<4x12xf32> to vector<4x3xf32>
    %c0_13 = arith.constant 0 : index
    %c0_14 = arith.constant 0 : index
    %26 = vector.load %arg2[%c0_13, %c0_14] : memref<16x16xf32, #tpu.memory_space<vmem>>, vector<10x6xf32>
    %c10 = arith.constant 10 : index
    %c0_15 = arith.constant 0 : index
    %27 = vector.load %arg2[%c10, %c0_15] : memref<16x16xf32, #tpu.memory_space<vmem>>, vector<1x6xf32>
    %c0_16 = arith.constant 0 : index
    %c0_17 = arith.constant 0 : index
    %28 = vector.load %arg2[%c0_16, %c0_17] : memref<16x16xf32, #tpu.memory_space<vmem>>, vector<10x3xf32>
    %c10_18 = arith.constant 10 : index
    %c0_19 = arith.constant 0 : index
    %29 = vector.load %arg2[%c10_18, %c0_19] : memref<16x16xf32, #tpu.memory_space<vmem>>, vector<1x3xf32>
    %c0_20 = arith.constant 0 : index
    %c6_21 = arith.constant 6 : index
    %30 = vector.load %arg2[%c0_20, %c6_21] : memref<16x16xf32, #tpu.memory_space<vmem>>, vector<3x3xf32>
    %c3_22 = arith.constant 3 : index
    %c6_23 = arith.constant 6 : index
    %31 = vector.load %arg2[%c3_22, %c6_23] : memref<16x16xf32, #tpu.memory_space<vmem>>, vector<3x3xf32>
    %c6_24 = arith.constant 6 : index
    %c6_25 = arith.constant 6 : index
    %32 = vector.load %arg2[%c6_24, %c6_25] : memref<16x16xf32, #tpu.memory_space<vmem>>, vector<4x3xf32>
    %c10_26 = arith.constant 10 : index
    %c6_27 = arith.constant 6 : index
    %33 = vector.load %arg2[%c10_26, %c6_27] : memref<16x16xf32, #tpu.memory_space<vmem>>, vector<1x3xf32>
    %34 = vector.extract_strided_slice %1 {offsets = [0, 0], sizes = [4, 1], strides = [1, 1]} : vector<4x10xf32> to vector<4x1xf32>
    %35 = vector.extract_strided_slice %26 {offsets = [0, 0], sizes = [1, 6], strides = [1, 1]} : vector<10x6xf32> to vector<1x6xf32>
    %36 = vector.broadcast %34 : vector<4x1xf32> to vector<4x6xf32>
    %37 = vector.broadcast %35 : vector<1x6xf32> to vector<4x6xf32>
    %38 = arith.mulf %36, %37 : vector<4x6xf32>
    %39 = vector.extract_strided_slice %1 {offsets = [0, 1], sizes = [4, 1], strides = [1, 1]} : vector<4x10xf32> to vector<4x1xf32>
    %40 = vector.extract_strided_slice %26 {offsets = [1, 0], sizes = [1, 6], strides = [1, 1]} : vector<10x6xf32> to vector<1x6xf32>
    %41 = vector.broadcast %39 : vector<4x1xf32> to vector<4x6xf32>
    %42 = vector.broadcast %40 : vector<1x6xf32> to vector<4x6xf32>
    %43 = arith.mulf %41, %42 : vector<4x6xf32>
    %44 = arith.addf %38, %43 : vector<4x6xf32>
    %45 = vector.extract_strided_slice %1 {offsets = [0, 2], sizes = [4, 1], strides = [1, 1]} : vector<4x10xf32> to vector<4x1xf32>
    %46 = vector.extract_strided_slice %26 {offsets = [2, 0], sizes = [1, 6], strides = [1, 1]} : vector<10x6xf32> to vector<1x6xf32>
    %47 = vector.broadcast %45 : vector<4x1xf32> to vector<4x6xf32>
    %48 = vector.broadcast %46 : vector<1x6xf32> to vector<4x6xf32>
    %49 = arith.mulf %47, %48 : vector<4x6xf32>
    %50 = arith.addf %44, %49 : vector<4x6xf32>
    %51 = vector.extract_strided_slice %1 {offsets = [0, 3], sizes = [4, 1], strides = [1, 1]} : vector<4x10xf32> to vector<4x1xf32>
    %52 = vector.extract_strided_slice %26 {offsets = [3, 0], sizes = [1, 6], strides = [1, 1]} : vector<10x6xf32> to vector<1x6xf32>
    %53 = vector.broadcast %51 : vector<4x1xf32> to vector<4x6xf32>
    %54 = vector.broadcast %52 : vector<1x6xf32> to vector<4x6xf32>
    %55 = arith.mulf %53, %54 : vector<4x6xf32>
    %56 = arith.addf %50, %55 : vector<4x6xf32>
    %57 = vector.extract_strided_slice %1 {offsets = [0, 4], sizes = [4, 1], strides = [1, 1]} : vector<4x10xf32> to vector<4x1xf32>
    %58 = vector.extract_strided_slice %26 {offsets = [4, 0], sizes = [1, 6], strides = [1, 1]} : vector<10x6xf32> to vector<1x6xf32>
    %59 = vector.broadcast %57 : vector<4x1xf32> to vector<4x6xf32>
    %60 = vector.broadcast %58 : vector<1x6xf32> to vector<4x6xf32>
    %61 = arith.mulf %59, %60 : vector<4x6xf32>
    %62 = arith.addf %56, %61 : vector<4x6xf32>
    %63 = vector.extract_strided_slice %1 {offsets = [0, 5], sizes = [4, 1], strides = [1, 1]} : vector<4x10xf32> to vector<4x1xf32>
    %64 = vector.extract_strided_slice %26 {offsets = [5, 0], sizes = [1, 6], strides = [1, 1]} : vector<10x6xf32> to vector<1x6xf32>
    %65 = vector.broadcast %63 : vector<4x1xf32> to vector<4x6xf32>
    %66 = vector.broadcast %64 : vector<1x6xf32> to vector<4x6xf32>
    %67 = arith.mulf %65, %66 : vector<4x6xf32>
    %68 = arith.addf %62, %67 : vector<4x6xf32>
    %69 = vector.extract_strided_slice %1 {offsets = [0, 6], sizes = [4, 1], strides = [1, 1]} : vector<4x10xf32> to vector<4x1xf32>
    %70 = vector.extract_strided_slice %26 {offsets = [6, 0], sizes = [1, 6], strides = [1, 1]} : vector<10x6xf32> to vector<1x6xf32>
    %71 = vector.broadcast %69 : vector<4x1xf32> to vector<4x6xf32>
    %72 = vector.broadcast %70 : vector<1x6xf32> to vector<4x6xf32>
    %73 = arith.mulf %71, %72 : vector<4x6xf32>
    %74 = arith.addf %68, %73 : vector<4x6xf32>
    %75 = vector.extract_strided_slice %1 {offsets = [0, 7], sizes = [4, 1], strides = [1, 1]} : vector<4x10xf32> to vector<4x1xf32>
    %76 = vector.extract_strided_slice %26 {offsets = [7, 0], sizes = [1, 6], strides = [1, 1]} : vector<10x6xf32> to vector<1x6xf32>
    %77 = vector.broadcast %75 : vector<4x1xf32> to vector<4x6xf32>
    %78 = vector.broadcast %76 : vector<1x6xf32> to vector<4x6xf32>
    %79 = arith.mulf %77, %78 : vector<4x6xf32>
    %80 = arith.addf %74, %79 : vector<4x6xf32>
    %81 = vector.extract_strided_slice %1 {offsets = [0, 8], sizes = [4, 1], strides = [1, 1]} : vector<4x10xf32> to vector<4x1xf32>
    %82 = vector.extract_strided_slice %26 {offsets = [8, 0], sizes = [1, 6], strides = [1, 1]} : vector<10x6xf32> to vector<1x6xf32>
    %83 = vector.broadcast %81 : vector<4x1xf32> to vector<4x6xf32>
    %84 = vector.broadcast %82 : vector<1x6xf32> to vector<4x6xf32>
    %85 = arith.mulf %83, %84 : vector<4x6xf32>
    %86 = arith.addf %80, %85 : vector<4x6xf32>
    %87 = vector.extract_strided_slice %1 {offsets = [0, 9], sizes = [4, 1], strides = [1, 1]} : vector<4x10xf32> to vector<4x1xf32>
    %88 = vector.extract_strided_slice %26 {offsets = [9, 0], sizes = [1, 6], strides = [1, 1]} : vector<10x6xf32> to vector<1x6xf32>
    %89 = vector.broadcast %87 : vector<4x1xf32> to vector<4x6xf32>
    %90 = vector.broadcast %88 : vector<1x6xf32> to vector<4x6xf32>
    %91 = arith.mulf %89, %90 : vector<4x6xf32>
    %92 = arith.addf %86, %91 : vector<4x6xf32>
    %93 = vector.broadcast %27 : vector<1x6xf32> to vector<4x6xf32>
    %94 = arith.addf %92, %93 : vector<4x6xf32>
    %95 = vector.extract_strided_slice %94 {offsets = [0, 0], sizes = [4, 3], strides = [1, 1]} : vector<4x6xf32> to vector<4x3xf32>
    %96 = vector.extract_strided_slice %94 {offsets = [0, 3], sizes = [4, 3], strides = [1, 1]} : vector<4x6xf32> to vector<4x3xf32>
    %97 = math.tanh %1 : vector<4x10xf32>
    %98 = vector.extract_strided_slice %97 {offsets = [0, 0], sizes = [4, 1], strides = [1, 1]} : vector<4x10xf32> to vector<4x1xf32>
    %99 = vector.extract_strided_slice %28 {offsets = [0, 0], sizes = [1, 3], strides = [1, 1]} : vector<10x3xf32> to vector<1x3xf32>
    %100 = vector.broadcast %98 : vector<4x1xf32> to vector<4x3xf32>
    %101 = vector.broadcast %99 : vector<1x3xf32> to vector<4x3xf32>
    %102 = arith.mulf %100, %101 : vector<4x3xf32>
    %103 = vector.extract_strided_slice %97 {offsets = [0, 1], sizes = [4, 1], strides = [1, 1]} : vector<4x10xf32> to vector<4x1xf32>
    %104 = vector.extract_strided_slice %28 {offsets = [1, 0], sizes = [1, 3], strides = [1, 1]} : vector<10x3xf32> to vector<1x3xf32>
    %105 = vector.broadcast %103 : vector<4x1xf32> to vector<4x3xf32>
    %106 = vector.broadcast %104 : vector<1x3xf32> to vector<4x3xf32>
    %107 = arith.mulf %105, %106 : vector<4x3xf32>
    %108 = arith.addf %102, %107 : vector<4x3xf32>
    %109 = vector.extract_strided_slice %97 {offsets = [0, 2], sizes = [4, 1], strides = [1, 1]} : vector<4x10xf32> to vector<4x1xf32>
    %110 = vector.extract_strided_slice %28 {offsets = [2, 0], sizes = [1, 3], strides = [1, 1]} : vector<10x3xf32> to vector<1x3xf32>
    %111 = vector.broadcast %109 : vector<4x1xf32> to vector<4x3xf32>
    %112 = vector.broadcast %110 : vector<1x3xf32> to vector<4x3xf32>
    %113 = arith.mulf %111, %112 : vector<4x3xf32>
    %114 = arith.addf %108, %113 : vector<4x3xf32>
    %115 = vector.extract_strided_slice %97 {offsets = [0, 3], sizes = [4, 1], strides = [1, 1]} : vector<4x10xf32> to vector<4x1xf32>
    %116 = vector.extract_strided_slice %28 {offsets = [3, 0], sizes = [1, 3], strides = [1, 1]} : vector<10x3xf32> to vector<1x3xf32>
    %117 = vector.broadcast %115 : vector<4x1xf32> to vector<4x3xf32>
    %118 = vector.broadcast %116 : vector<1x3xf32> to vector<4x3xf32>
    %119 = arith.mulf %117, %118 : vector<4x3xf32>
    %120 = arith.addf %114, %119 : vector<4x3xf32>
    %121 = vector.extract_strided_slice %97 {offsets = [0, 4], sizes = [4, 1], strides = [1, 1]} : vector<4x10xf32> to vector<4x1xf32>
    %122 = vector.extract_strided_slice %28 {offsets = [4, 0], sizes = [1, 3], strides = [1, 1]} : vector<10x3xf32> to vector<1x3xf32>
    %123 = vector.broadcast %121 : vector<4x1xf32> to vector<4x3xf32>
    %124 = vector.broadcast %122 : vector<1x3xf32> to vector<4x3xf32>
    %125 = arith.mulf %123, %124 : vector<4x3xf32>
    %126 = arith.addf %120, %125 : vector<4x3xf32>
    %127 = vector.extract_strided_slice %97 {offsets = [0, 5], sizes = [4, 1], strides = [1, 1]} : vector<4x10xf32> to vector<4x1xf32>
    %128 = vector.extract_strided_slice %28 {offsets = [5, 0], sizes = [1, 3], strides = [1, 1]} : vector<10x3xf32> to vector<1x3xf32>
    %129 = vector.broadcast %127 : vector<4x1xf32> to vector<4x3xf32>
    %130 = vector.broadcast %128 : vector<1x3xf32> to vector<4x3xf32>
    %131 = arith.mulf %129, %130 : vector<4x3xf32>
    %132 = arith.addf %126, %131 : vector<4x3xf32>
    %133 = vector.extract_strided_slice %97 {offsets = [0, 6], sizes = [4, 1], strides = [1, 1]} : vector<4x10xf32> to vector<4x1xf32>
    %134 = vector.extract_strided_slice %28 {offsets = [6, 0], sizes = [1, 3], strides = [1, 1]} : vector<10x3xf32> to vector<1x3xf32>
    %135 = vector.broadcast %133 : vector<4x1xf32> to vector<4x3xf32>
    %136 = vector.broadcast %134 : vector<1x3xf32> to vector<4x3xf32>
    %137 = arith.mulf %135, %136 : vector<4x3xf32>
    %138 = arith.addf %132, %137 : vector<4x3xf32>
    %139 = vector.extract_strided_slice %97 {offsets = [0, 7], sizes = [4, 1], strides = [1, 1]} : vector<4x10xf32> to vector<4x1xf32>
    %140 = vector.extract_strided_slice %28 {offsets = [7, 0], sizes = [1, 3], strides = [1, 1]} : vector<10x3xf32> to vector<1x3xf32>
    %141 = vector.broadcast %139 : vector<4x1xf32> to vector<4x3xf32>
    %142 = vector.broadcast %140 : vector<1x3xf32> to vector<4x3xf32>
    %143 = arith.mulf %141, %142 : vector<4x3xf32>
    %144 = arith.addf %138, %143 : vector<4x3xf32>
    %145 = vector.extract_strided_slice %97 {offsets = [0, 8], sizes = [4, 1], strides = [1, 1]} : vector<4x10xf32> to vector<4x1xf32>
    %146 = vector.extract_strided_slice %28 {offsets = [8, 0], sizes = [1, 3], strides = [1, 1]} : vector<10x3xf32> to vector<1x3xf32>
    %147 = vector.broadcast %145 : vector<4x1xf32> to vector<4x3xf32>
    %148 = vector.broadcast %146 : vector<1x3xf32> to vector<4x3xf32>
    %149 = arith.mulf %147, %148 : vector<4x3xf32>
    %150 = arith.addf %144, %149 : vector<4x3xf32>
    %151 = vector.extract_strided_slice %97 {offsets = [0, 9], sizes = [4, 1], strides = [1, 1]} : vector<4x10xf32> to vector<4x1xf32>
    %152 = vector.extract_strided_slice %28 {offsets = [9, 0], sizes = [1, 3], strides = [1, 1]} : vector<10x3xf32> to vector<1x3xf32>
    %153 = vector.broadcast %151 : vector<4x1xf32> to vector<4x3xf32>
    %154 = vector.broadcast %152 : vector<1x3xf32> to vector<4x3xf32>
    %155 = arith.mulf %153, %154 : vector<4x3xf32>
    %156 = arith.addf %150, %155 : vector<4x3xf32>
    %157 = vector.broadcast %29 : vector<1x3xf32> to vector<4x3xf32>
    %158 = arith.addf %156, %157 : vector<4x3xf32>
    %159 = vector.extract_strided_slice %1 {offsets = [0, 0], sizes = [3, 9], strides = [1, 1]} : vector<4x10xf32> to vector<3x9xf32>
    %160 = vector.shape_cast %159 : vector<3x9xf32> to vector<1x3x9xf32>
    %cst_28 = arith.constant dense<0.000000e+00> : vector<1xf32>
    %161 = vector.multi_reduction <add>, %160, %cst_28 [1, 2] : vector<1x3x9xf32> to vector<1xf32>
    %162 = vector.shape_cast %161 : vector<1xf32> to vector<1x1x1xf32>
    %163 = vector.extract %162[0, 0, 0] : f32 from vector<1x1x1xf32>
    %cst_29 = arith.constant 2.700000e+01 : f32
    %164 = arith.divf %163, %cst_29 : f32
    %165 = vector.extract_strided_slice %1 {offsets = [0, 1], sizes = [3, 9], strides = [1, 1]} : vector<4x10xf32> to vector<3x9xf32>
    %166 = vector.shape_cast %165 : vector<3x9xf32> to vector<1x3x9xf32>
    %cst_30 = arith.constant dense<0.000000e+00> : vector<1xf32>
    %167 = vector.multi_reduction <add>, %166, %cst_30 [1, 2] : vector<1x3x9xf32> to vector<1xf32>
    %168 = vector.shape_cast %167 : vector<1xf32> to vector<1x1x1xf32>
    %169 = vector.extract %168[0, 0, 0] : f32 from vector<1x1x1xf32>
    %cst_31 = arith.constant 2.700000e+01 : f32
    %170 = arith.divf %169, %cst_31 : f32
    %171 = vector.extract_strided_slice %1 {offsets = [1, 0], sizes = [3, 9], strides = [1, 1]} : vector<4x10xf32> to vector<3x9xf32>
    %172 = vector.shape_cast %171 : vector<3x9xf32> to vector<1x3x9xf32>
    %cst_32 = arith.constant dense<0.000000e+00> : vector<1xf32>
    %173 = vector.multi_reduction <add>, %172, %cst_32 [1, 2] : vector<1x3x9xf32> to vector<1xf32>
    %174 = vector.shape_cast %173 : vector<1xf32> to vector<1x1x1xf32>
    %175 = vector.extract %174[0, 0, 0] : f32 from vector<1x1x1xf32>
    %cst_33 = arith.constant 2.700000e+01 : f32
    %176 = arith.divf %175, %cst_33 : f32
    %177 = vector.extract_strided_slice %1 {offsets = [1, 1], sizes = [3, 9], strides = [1, 1]} : vector<4x10xf32> to vector<3x9xf32>
    %178 = vector.shape_cast %177 : vector<3x9xf32> to vector<1x3x9xf32>
    %cst_34 = arith.constant dense<0.000000e+00> : vector<1xf32>
    %179 = vector.multi_reduction <add>, %178, %cst_34 [1, 2] : vector<1x3x9xf32> to vector<1xf32>
    %180 = vector.shape_cast %179 : vector<1xf32> to vector<1x1x1xf32>
    %181 = vector.extract %180[0, 0, 0] : f32 from vector<1x1x1xf32>
    %cst_35 = arith.constant 2.700000e+01 : f32
    %182 = arith.divf %181, %cst_35 : f32
    %183 = vector.extract_strided_slice %32 {offsets = [0, 0], sizes = [1, 3], strides = [1, 1]} : vector<4x3xf32> to vector<1x3xf32>
    %184 = vector.broadcast %164 : f32 to vector<1x3xf32>
    %185 = arith.mulf %184, %183 : vector<1x3xf32>
    %186 = arith.addf %33, %185 : vector<1x3xf32>
    %187 = vector.extract_strided_slice %32 {offsets = [1, 0], sizes = [1, 3], strides = [1, 1]} : vector<4x3xf32> to vector<1x3xf32>
    %188 = vector.broadcast %170 : f32 to vector<1x3xf32>
    %189 = arith.mulf %188, %187 : vector<1x3xf32>
    %190 = arith.addf %186, %189 : vector<1x3xf32>
    %191 = vector.extract_strided_slice %32 {offsets = [2, 0], sizes = [1, 3], strides = [1, 1]} : vector<4x3xf32> to vector<1x3xf32>
    %192 = vector.broadcast %176 : f32 to vector<1x3xf32>
    %193 = arith.mulf %192, %191 : vector<1x3xf32>
    %194 = arith.addf %190, %193 : vector<1x3xf32>
    %195 = vector.extract_strided_slice %32 {offsets = [3, 0], sizes = [1, 3], strides = [1, 1]} : vector<4x3xf32> to vector<1x3xf32>
    %196 = vector.broadcast %182 : f32 to vector<1x3xf32>
    %197 = arith.mulf %196, %195 : vector<1x3xf32>
    %198 = arith.addf %194, %197 : vector<1x3xf32>
    %199 = arith.addf %95, %2 : vector<4x3xf32>
    %200 = vector.broadcast %198 : vector<1x3xf32> to vector<4x3xf32>
    %201 = arith.addf %199, %200 : vector<4x3xf32>
    %202 = arith.addf %201, %4 : vector<4x3xf32>
    %cst_36 = arith.constant 5.000000e-01 : f32
    %203 = vector.broadcast %cst_36 : f32 to vector<4x3xf32>
    %204 = arith.mulf %203, %95 : vector<4x3xf32>
    %cst_37 = arith.constant 4.471500e-02 : f32
    %205 = vector.broadcast %cst_37 : f32 to vector<4x3xf32>
    %206 = arith.mulf %205, %95 : vector<4x3xf32>
    %207 = arith.mulf %206, %95 : vector<4x3xf32>
    %208 = arith.mulf %207, %95 : vector<4x3xf32>
    %209 = arith.addf %95, %208 : vector<4x3xf32>
    %cst_38 = arith.constant 0.797884583 : f32
    %210 = vector.broadcast %cst_38 : f32 to vector<4x3xf32>
    %211 = arith.mulf %210, %209 : vector<4x3xf32>
    %212 = math.tanh %211 : vector<4x3xf32>
    %cst_39 = arith.constant 1.000000e+00 : f32
    %213 = vector.broadcast %cst_39 : f32 to vector<4x3xf32>
    %214 = arith.addf %213, %212 : vector<4x3xf32>
    %215 = arith.mulf %204, %214 : vector<4x3xf32>
    %216 = arith.addf %202, %215 : vector<4x3xf32>
    %217 = arith.mulf %22, %96 : vector<4x3xf32>
    %218 = arith.addf %216, %217 : vector<4x3xf32>
    %219 = arith.addf %5, %3 : vector<4x3xf32>
    %220 = vector.extract_strided_slice %218 {offsets = [0, 0], sizes = [4, 1], strides = [1, 1]} : vector<4x3xf32> to vector<4x1xf32>
    %221 = vector.extract_strided_slice %30 {offsets = [0, 0], sizes = [1, 3], strides = [1, 1]} : vector<3x3xf32> to vector<1x3xf32>
    %222 = vector.broadcast %220 : vector<4x1xf32> to vector<4x3xf32>
    %223 = vector.broadcast %221 : vector<1x3xf32> to vector<4x3xf32>
    %224 = arith.mulf %222, %223 : vector<4x3xf32>
    %225 = vector.extract_strided_slice %218 {offsets = [0, 1], sizes = [4, 1], strides = [1, 1]} : vector<4x3xf32> to vector<4x1xf32>
    %226 = vector.extract_strided_slice %30 {offsets = [1, 0], sizes = [1, 3], strides = [1, 1]} : vector<3x3xf32> to vector<1x3xf32>
    %227 = vector.broadcast %225 : vector<4x1xf32> to vector<4x3xf32>
    %228 = vector.broadcast %226 : vector<1x3xf32> to vector<4x3xf32>
    %229 = arith.mulf %227, %228 : vector<4x3xf32>
    %230 = arith.addf %224, %229 : vector<4x3xf32>
    %231 = vector.extract_strided_slice %218 {offsets = [0, 2], sizes = [4, 1], strides = [1, 1]} : vector<4x3xf32> to vector<4x1xf32>
    %232 = vector.extract_strided_slice %30 {offsets = [2, 0], sizes = [1, 3], strides = [1, 1]} : vector<3x3xf32> to vector<1x3xf32>
    %233 = vector.broadcast %231 : vector<4x1xf32> to vector<4x3xf32>
    %234 = vector.broadcast %232 : vector<1x3xf32> to vector<4x3xf32>
    %235 = arith.mulf %233, %234 : vector<4x3xf32>
    %236 = arith.addf %230, %235 : vector<4x3xf32>
    %237 = vector.broadcast %29 : vector<1x3xf32> to vector<4x3xf32>
    %238 = arith.addf %236, %237 : vector<4x3xf32>
    %239 = vector.extract_strided_slice %97 {offsets = [0, 0], sizes = [3, 3], strides = [1, 1]} : vector<4x10xf32> to vector<3x3xf32>
    %cst_40 = arith.constant dense<0.000000e+00> : vector<4x3xf32>
    %240 = tpu.matmul %219, %239, %cst_40 {dimension_numbers = #tpu.dot_dimension_numbers<[1], [1], [0], [0], [0, 0, 1, 0], [], []>} : vector<4x3xf32>, vector<3x3xf32>, vector<4x3xf32> -> vector<4x3xf32>
    %241 = vector.extract_strided_slice %219 {offsets = [0, 0], sizes = [4, 1], strides = [1, 1]} : vector<4x3xf32> to vector<4x1xf32>
    %242 = vector.extract_strided_slice %31 {offsets = [0, 0], sizes = [1, 3], strides = [1, 1]} : vector<3x3xf32> to vector<1x3xf32>
    %243 = vector.broadcast %241 : vector<4x1xf32> to vector<4x3xf32>
    %244 = vector.broadcast %242 : vector<1x3xf32> to vector<4x3xf32>
    %245 = arith.mulf %243, %244 : vector<4x3xf32>
    %246 = vector.extract_strided_slice %219 {offsets = [0, 1], sizes = [4, 1], strides = [1, 1]} : vector<4x3xf32> to vector<4x1xf32>
    %247 = vector.extract_strided_slice %31 {offsets = [1, 0], sizes = [1, 3], strides = [1, 1]} : vector<3x3xf32> to vector<1x3xf32>
    %248 = vector.broadcast %246 : vector<4x1xf32> to vector<4x3xf32>
    %249 = vector.broadcast %247 : vector<1x3xf32> to vector<4x3xf32>
    %250 = arith.mulf %248, %249 : vector<4x3xf32>
    %251 = arith.addf %245, %250 : vector<4x3xf32>
    %252 = vector.extract_strided_slice %219 {offsets = [0, 2], sizes = [4, 1], strides = [1, 1]} : vector<4x3xf32> to vector<4x1xf32>
    %253 = vector.extract_strided_slice %31 {offsets = [2, 0], sizes = [1, 3], strides = [1, 1]} : vector<3x3xf32> to vector<1x3xf32>
    %254 = vector.broadcast %252 : vector<4x1xf32> to vector<4x3xf32>
    %255 = vector.broadcast %253 : vector<1x3xf32> to vector<4x3xf32>
    %256 = arith.mulf %254, %255 : vector<4x3xf32>
    %257 = arith.addf %251, %256 : vector<4x3xf32>
    %258 = arith.subf %96, %257 : vector<4x3xf32>
    %cst_41 = arith.constant 0.000000e+00 : f32
    %259 = vector.broadcast %cst_41 : f32 to vector<4x3xf32>
    %260 = arith.subf %259, %218 : vector<4x3xf32>
    %261 = arith.addf %260, %158 : vector<4x3xf32>
    %262 = arith.addf %261, %258 : vector<4x3xf32>
    %263 = arith.mulf %218, %219 : vector<4x3xf32>
    %264 = arith.mulf %23, %219 : vector<4x3xf32>
    %265 = arith.addf %238, %240 : vector<4x3xf32>
    %266 = arith.mulf %264, %265 : vector<4x3xf32>
    %267 = arith.addf %263, %266 : vector<4x3xf32>
    %268 = math.tanh %198 : vector<1x3xf32>
    %269 = vector.broadcast %268 : vector<1x3xf32> to vector<4x3xf32>
    %270 = arith.addf %267, %269 : vector<4x3xf32>
    %271 = arith.mulf %24, %219 : vector<4x3xf32>
    %272 = arith.mulf %271, %262 : vector<4x3xf32>
    %273 = arith.mulf %25, %272 : vector<4x3xf32>
    %274 = arith.addf %270, %273 : vector<4x3xf32>
    %c0_42 = arith.constant 0 : index
    %c0_43 = arith.constant 0 : index
    %275 = vector.load %arg3[%c0_42, %c0_43] : memref<4x3xf32, #tpu.memory_space<vmem>>, vector<4x3xf32>
    tpu.vector_store %arg3[%c0_42, %c0_43], %274 {strides = array<i32>} : memref<4x3xf32, #tpu.memory_space<vmem>>, vector<4x3xf32>,
    return
  }
}

</mosaic_0001>

<llo_original>
// kernel: _forward_impl.3
$region0: #{_forward_impl.3}
  #allocation0 [shape = 'u32[]', space=smem, size = 0x4, offset = 0x4, fixed_abs, tag = 'smem constant byte address 0x4 - core index']
  #allocation1 [shape = 'u32[144,128]{1,0:T(1,128)}', space=vmem, size = 0x12000, scoped, tag = 'internal scratch']
  %s0 = inlined_call_operand.vmem [shape: f32[1,1,4,10], index: 0, kind: input, shape index: {}]
  %s1 = inlined_call_operand.vmem [shape: f32[4,24], index: 1, kind: input, shape index: {}]
  %s2 = inlined_call_operand.vmem [shape: f32[16,16], index: 2, kind: input, shape index: {}]
  %s3 = inlined_call_operand.vmem [shape: f32[4,3], index: 3, kind: output, shape index: {}]
  %s4 = sld [smem:[#allocation0]]
  $region22: #{_forward_impl.3} parent=0
    _
  %s6 = ssub.s32 1, %s4
  %s7 = scalar_select 0, %s6, %s4
  // Predicated region
  $region2: #{_forward_impl.3} parent=0 // pred_check
    _
  $region3: #{_forward_impl.3} parent=0 // pred_check_branch
    %9 = sbr.rel (0) target = $region5
  $region4: #{_forward_impl.3} parent=0 // pred_region
    _
  $region5: #{_forward_impl.3} parent=0 // pred_fallthru
    _
  // Predicated region
  $region6: #{_forward_impl.3} parent=0 // pred_check
    _
  $region7: #{_forward_impl.3} parent=0 // pred_check_branch
    %11 = sbr.rel (0) target = $region9
  $region8: #{_forward_impl.3} parent=0 // pred_region
    _
  $region9: #{_forward_impl.3} parent=0 // pred_fallthru
    _
  // Predicated region
  $region10: #{_forward_impl.3} parent=0 // pred_check
    _
  $region11: #{_forward_impl.3} parent=0 // pred_check_branch
    %13 = sbr.rel (0) target = $region13
  $region12: #{_forward_impl.3} parent=0 // pred_region
    _
  $region13: #{_forward_impl.3} parent=0 // pred_fallthru
    _
  %v14 = vld [vmem:[%s0] sm:$0xf]
  %v15 = vld [vmem:[%s1] sm:$0xf]
  %v16 = vlaneseq
  %v17 = vand.u32 %v16, 127
  %vm18 = vcmp.ge.s32.totalorder %v17, 6
  %vm19 = vcmp.lt.s32.totalorder %v17, 9
  %vm20 = vmand %vm18, %vm19
  %v21 = vsel %vm20, 0.5, 0.7
  %v22 = vsel %vm20, 2.0, 1.4285715
  %24 = vrot.lane.b32.xlu0 %v21, 12
  %v25 = vpop.permute.xlu0 %24
  %vm27 = vcmp.lt.f32.partialorder %v15, %v25
  %29 = vrot.lane.b32.xlu0 %v22, 12
  %v30 = vpop.permute.xlu0 %29
  %v32 = vsel %vm27, %v30, 0.0
  %v33 = vld [vmem:[%s2] sm:$0xff]
  %v34 = vld [vmem:[%s2 + $0x8] sm:$0x3]
  %v35 = vld [vmem:[%s2 + $0xa] sm:$0x1]
  %v36 = vld [vmem:[%s2] sm:$0x7]
  %v37 = vld [vmem:[%s2 + $0x3] sm:$0x7]
  %v38 = vld [vmem:[%s2 + $0x6] sm:$0xf]
  %40 = vset.pattern.permute.xlu0 0
  %41 = vperm.xlu0 %40, %v14
  %v42 = vpop.permute.xlu0 %41
  %v44 = vlaneseq
  %v45 = vshrl.u32 %v44, 7
  %v46 = vsub.s32 0, %v45
  %v47 = vrot.slane %v33, %v46
  %v48 = vmul.f32 %v42, %v47
  %49 = vset.pattern.permute.xlu0 1
  %50 = vperm.xlu0 %49, %v14
  %v51 = vpop.permute.xlu0 %50
  %v53 = vlaneseq
  %v54 = vshrl.u32 %v53, 7
  %v55 = vsub.s32 1, %v54
  %v56 = vrot.slane %v33, %v55
  %v57 = vmul.f32 %v51, %v56
  %v58 = vadd.f32 %v48, %v57
  %59 = vset.pattern.permute.xlu0 2
  %60 = vperm.xlu0 %59, %v14
  %v61 = vpop.permute.xlu0 %60
  %v63 = vlaneseq
  %v64 = vshrl.u32 %v63, 7
  %v65 = vsub.s32 2, %v64
  %v66 = vrot.slane %v33, %v65
  %v67 = vmul.f32 %v61, %v66
  %v68 = vadd.f32 %v58, %v67
  %69 = vset.pattern.permute.xlu0 3
  %70 = vperm.xlu0 %69, %v14
  %v71 = vpop.permute.xlu0 %70
  %v73 = vlaneseq
  %v74 = vshrl.u32 %v73, 7
  %v75 = vsub.s32 3, %v74
  %v76 = vrot.slane %v33, %v75
  %v77 = vmul.f32 %v71, %v76
  %v78 = vadd.f32 %v68, %v77
  %79 = vset.pattern.permute.xlu0 4
  %80 = vperm.xlu0 %79, %v14
  %v81 = vpop.permute.xlu0 %80
  %v83 = vlaneseq
  %v84 = vshrl.u32 %v83, 7
  %v85 = vsub.s32 4, %v84
  %v86 = vrot.slane %v33, %v85
  %v87 = vmul.f32 %v81, %v86
  %v88 = vadd.f32 %v78, %v87
  %89 = vset.pattern.permute.xlu0 5
  %90 = vperm.xlu0 %89, %v14
  %v91 = vpop.permute.xlu0 %90
  %v93 = vlaneseq
  %v94 = vshrl.u32 %v93, 7
  %v95 = vsub.s32 5, %v94
  %v96 = vrot.slane %v33, %v95
  %v97 = vmul.f32 %v91, %v96
  %v98 = vadd.f32 %v88, %v97
  %99 = vset.pattern.permute.xlu0 6
  %100 = vperm.xlu0 %99, %v14
  %v101 = vpop.permute.xlu0 %100
  %v103 = vlaneseq
  %v104 = vshrl.u32 %v103, 7
  %v105 = vsub.s32 6, %v104
  %v106 = vrot.slane %v33, %v105
  %v107 = vmul.f32 %v101, %v106
  %v108 = vadd.f32 %v98, %v107
  %109 = vset.pattern.permute.xlu0 7
  %110 = vperm.xlu0 %109, %v14
  %v111 = vpop.permute.xlu0 %110
  %v113 = vlaneseq
  %v114 = vshrl.u32 %v113, 7
  %v115 = vsub.s32 7, %v114
  %v116 = vrot.slane %v33, %v115
  %v117 = vmul.f32 %v111, %v116
  %v118 = vadd.f32 %v108, %v117
  %119 = vset.pattern.permute.xlu0 8
  %120 = vperm.xlu0 %119, %v14
  %v121 = vpop.permute.xlu0 %120
  %v123 = vlaneseq
  %v124 = vshrl.u32 %v123, 7
  %v125 = vsub.s32 0, %v124
  %v126 = vrot.slane %v34, %v125
  %v127 = vmul.f32 %v121, %v126
  %v128 = vadd.f32 %v118, %v127
  %129 = vset.pattern.permute.xlu0 9
  %130 = vperm.xlu0 %129, %v14
  %v131 = vpop.permute.xlu0 %130
  %v133 = vlaneseq
  %v134 = vshrl.u32 %v133, 7
  %v135 = vsub.s32 1, %v134
  %v136 = vrot.slane %v34, %v135
  %v137 = vmul.f32 %v131, %v136
  %v138 = vadd.f32 %v128, %v137
  %v139 = vlaneseq
  %v140 = vshrl.u32 %v139, 7
  %v141 = vsub.s32 0, %v140
  %v142 = vrot.slane %v35, %v141
  %v143 = vadd.f32 %v138, %v142
  %v144 = vtanh.pop %v14
  %146 = vset.pattern.permute.xlu0 0
  %147 = vperm.xlu0 %146, %v144
  %v148 = vpop.permute.xlu0 %147
  %v150 = vmul.f32 %v148, %v47
  %151 = vset.pattern.permute.xlu0 1
  %152 = vperm.xlu0 %151, %v144
  %v153 = vpop.permute.xlu0 %152
  %v155 = vmul.f32 %v153, %v56
  %v156 = vadd.f32 %v150, %v155
  %157 = vset.pattern.permute.xlu0 2
  %158 = vperm.xlu0 %157, %v144
  %v159 = vpop.permute.xlu0 %158
  %v161 = vmul.f32 %v159, %v66
  %v162 = vadd.f32 %v156, %v161
  %163 = vset.pattern.permute.xlu0 3
  %164 = vperm.xlu0 %163, %v144
  %v165 = vpop.permute.xlu0 %164
  %v167 = vmul.f32 %v165, %v76
  %v168 = vadd.f32 %v162, %v167
  %169 = vset.pattern.permute.xlu0 4
  %170 = vperm.xlu0 %169, %v144
  %v171 = vpop.permute.xlu0 %170
  %v173 = vmul.f32 %v171, %v86
  %v174 = vadd.f32 %v168, %v173
  %175 = vset.pattern.permute.xlu0 5
  %176 = vperm.xlu0 %175, %v144
  %v177 = vpop.permute.xlu0 %176
  %v179 = vmul.f32 %v177, %v96
  %v180 = vadd.f32 %v174, %v179
  %181 = vset.pattern.permute.xlu0 6
  %182 = vperm.xlu0 %181, %v144
  %v183 = vpop.permute.xlu0 %182
  %v185 = vmul.f32 %v183, %v106
  %v186 = vadd.f32 %v180, %v185
  %187 = vset.pattern.permute.xlu0 7
  %188 = vperm.xlu0 %187, %v144
  %v189 = vpop.permute.xlu0 %188
  %v191 = vmul.f32 %v189, %v116
  %v192 = vadd.f32 %v186, %v191
  %193 = vset.pattern.permute.xlu0 8
  %194 = vperm.xlu0 %193, %v144
  %v195 = vpop.permute.xlu0 %194
  %v197 = vmul.f32 %v195, %v126
  %v198 = vadd.f32 %v192, %v197
  %199 = vset.pattern.permute.xlu0 9
  %200 = vperm.xlu0 %199, %v144
  %v201 = vpop.permute.xlu0 %200
  %v203 = vmul.f32 %v201, %v136
  %v204 = vadd.f32 %v198, %v203
  %v205 = vadd.f32 %v204, %v142
  %vm206 = vcmask 67584
  %v207 = vsel %vm206, %v14, 0.0
  %208 = vadd.xlane.f32.xlu0 %v207
  %v209 = vpop.xlane.xlu0 %208
  %v210 = vrot.slane %v209, 4
  %v211 = vadd.f32 %v209, %v210
  %v212 = vrot.slane %v211, 2
  %v213 = vadd.f32 %v211, %v212
  %v214 = vrot.slane %v213, 1
  %v215 = vadd.f32 %v213, %v214
  %s216 = vtos %v215
  %v217 = vrcp.pop 27.0
  %s218 = vtos %v217
  %s219 = smul.f32 %s216, %s218
  %220 = vrot.lane.b32.xlu0 %v14, 127
  %v221 = vpop.permute.xlu0 %220
  %v223 = vsel %vm206, %v221, 0.0
  %224 = vadd.xlane.f32.xlu0 %v223
  %v225 = vpop.xlane.xlu0 %224
  %v226 = vrot.slane %v225, 4
  %v227 = vadd.f32 %v225, %v226
  %v228 = vrot.slane %v227, 2
  %v229 = vadd.f32 %v227, %v228
  %v230 = vrot.slane %v229, 1
  %v231 = vadd.f32 %v229, %v230
  %s232 = vtos %v231
  %v233 = vrcp.pop 27.0
  %s234 = vtos %v233
  %s235 = smul.f32 %s232, %s234
  %v236 = vrot.slane %v14, 1
  %v238 = vsel %vm206, %v236, 0.0
  %239 = vadd.xlane.f32.xlu0 %v238
  %v240 = vpop.xlane.xlu0 %239
  %v241 = vrot.slane %v240, 4
  %v242 = vadd.f32 %v240, %v241
  %v243 = vrot.slane %v242, 2
  %v244 = vadd.f32 %v242, %v243
  %v245 = vrot.slane %v244, 1
  %v246 = vadd.f32 %v244, %v245
  %s247 = vtos %v246
  %v248 = vrcp.pop 27.0
  %s249 = vtos %v248
  %s250 = smul.f32 %s247, %s249
  %251 = vrot.lane.b32.xlu0 %v236, 127
  %v252 = vpop.permute.xlu0 %251
  %v254 = vsel %vm206, %v252, 0.0
  %255 = vadd.xlane.f32.xlu0 %v254
  %v256 = vpop.xlane.xlu0 %255
  %v257 = vrot.slane %v256, 4
  %v258 = vadd.f32 %v256, %v257
  %v259 = vrot.slane %v258, 2
  %v260 = vadd.f32 %v258, %v259
  %v261 = vrot.slane %v260, 1
  %v262 = vadd.f32 %v260, %v261
  %s263 = vtos %v262
  %v264 = vrcp.pop 27.0
  %s265 = vtos %v264
  %s266 = smul.f32 %s263, %s265
  %v267 = vstv %s219
  %v268 = vmul.f32 %v267, %v38
  %v269 = vadd.f32 %v35, %v268
  %v270 = vstv %s235
  %v271 = vmul.f32 %v270, %v38
  %v273 = vrot.slane %v271, 1
  %v275 = vadd.f32 %v269, %v273
  %v276 = vstv %s250
  %v277 = vmul.f32 %v276, %v38
  %v279 = vrot.slane %v277, 2
  %v281 = vadd.f32 %v275, %v279
  %v282 = vstv %s266
  %v283 = vmul.f32 %v282, %v38
  %v285 = vrot.slane %v283, 3
  %v287 = vadd.f32 %v281, %v285
  %v288 = vadd.f32 %v143, %v15
  %v289 = vlaneseq
  %v290 = vshrl.u32 %v289, 7
  %v291 = vsub.s32 0, %v290
  %v292 = vrot.slane %v287, %v291
  %294 = vrot.lane.b32.xlu0 %v292, 122
  %v295 = vpop.permute.xlu0 %294
  %v297 = vadd.f32 %v288, %v295
  %299 = vrot.lane.b32.xlu0 %v15, 122
  %v300 = vpop.permute.xlu0 %299
  %v302 = vadd.f32 %v297, %v300
  %v303 = vmul.f32 %v143, 0.5
  %v304 = vmul.f32 %v143, 0.044715
  %v305 = vmul.f32 %v304, %v143
  %v306 = vmul.f32 %v305, %v143
  %v307 = vadd.f32 %v143, %v306
  %v308 = vmul.f32 %v307, 0.7978846
  %v309 = vtanh.pop %v308
  %v310 = vadd.f32 %v309, 1.0
  %v311 = vmul.f32 %v303, %v310
  %v312 = vadd.f32 %v302, %v311
  %314 = vrot.lane.b32.xlu0 %v143, 9
  %v315 = vpop.permute.xlu0 %314
  %v317 = vmul.f32 %v32, %v315
  %319 = vrot.lane.b32.xlu0 %v317, 116
  %v320 = vpop.permute.xlu0 %319
  %v322 = vadd.f32 %v312, %v320
  %323 = vrot.lane.b32.xlu0 %v15, 6
  %v324 = vpop.permute.xlu0 %323
  %v326 = vadd.f32 %v15, %v324
  %328 = vset.pattern.permute.xlu0 0
  %329 = vperm.xlu0 %328, %v322
  %v330 = vpop.permute.xlu0 %329
  %v332 = vlaneseq
  %v333 = vshrl.u32 %v332, 7
  %v334 = vsub.s32 0, %v333
  %v335 = vrot.slane %v36, %v334
  %v336 = vmul.f32 %v330, %v335
  %337 = vset.pattern.permute.xlu0 1
  %338 = vperm.xlu0 %337, %v322
  %v339 = vpop.permute.xlu0 %338
  %v341 = vlaneseq
  %v342 = vshrl.u32 %v341, 7
  %v343 = vsub.s32 1, %v342
  %v344 = vrot.slane %v36, %v343
  %v345 = vmul.f32 %v339, %v344
  %v346 = vadd.f32 %v336, %v345
  %347 = vset.pattern.permute.xlu0 2
  %348 = vperm.xlu0 %347, %v322
  %v349 = vpop.permute.xlu0 %348
  %v351 = vlaneseq
  %v352 = vshrl.u32 %v351, 7
  %v353 = vsub.s32 2, %v352
  %v354 = vrot.slane %v36, %v353
  %v355 = vmul.f32 %v349, %v354
  %v356 = vadd.f32 %v346, %v355
  %358 = vrot.lane.b32.xlu0 %v142, 6
  %v359 = vpop.permute.xlu0 %358
  %v361 = vadd.f32 %v356, %v359
  %363 = vrot.lane.b32.xlu0 %v326, 119
  %v364 = vpop.permute.xlu0 %363
  %vm365 = vcmask 23552
  %v366 = vsel %vm365, %v364, 0
  %v368 = vsel %vm365, %v144, 0
  %370 = vmatprep.subr.mxu0 0.0
  %371 = vmatpush1.xpose.msra.mxu0 %v368
  %372 = vmatprep.subr.mxu0 0.0
  %373 = vmatpush1.xpose.msra.mxu0 0.0
  %374 = vmatprep.subr.mxu0 0.0
  %375 = vmatpush1.xpose.msra.mxu0 0.0
  %376 = vmatprep.subr.mxu0 0.0
  %377 = vmatpush1.xpose.msra.mxu0 0.0
  %378 = vmatprep.subr.mxu0 0.0
  %379 = vmatpush1.xpose.msra.mxu0 0.0
  %380 = vmatprep.subr.mxu0 0.0
  %381 = vmatpush1.xpose.msra.mxu0 0.0
  %382 = vmatprep.subr.mxu0 0.0
  %383 = vmatpush1.xpose.msra.mxu0 0.0
  %384 = vmatprep.subr.mxu0 0.0
  %385 = vmatpush1.xpose.msra.mxu0 0.0
  %386 = vmatprep.subr.mxu0 0.0
  %387 = vmatpush1.xpose.msra.mxu0 0.0
  %388 = vmatprep.subr.mxu0 0.0
  %389 = vmatpush1.xpose.msra.mxu0 0.0
  %390 = vmatprep.subr.mxu0 0.0
  %391 = vmatpush1.xpose.msra.mxu0 0.0
  %392 = vmatprep.subr.mxu0 0.0
  %393 = vmatpush1.xpose.msra.mxu0 0.0
  %394 = vmatprep.subr.mxu0 0.0
  %395 = vmatpush1.xpose.msra.mxu0 0.0
  %396 = vmatprep.subr.mxu0 0.0
  %397 = vmatpush1.xpose.msra.mxu0 0.0
  %398 = vmatprep.subr.mxu0 0.0
  %399 = vmatpush1.xpose.msra.mxu0 0.0
  %400 = vmatprep.subr.mxu0 0.0
  %401 = vmatpush1.xpose.msra.mxu0 0.0
  %402 = vmatprep.subr.mxu0 0.0
  %403 = vmatpush1.xpose.msra.mxu0 0.0
  %404 = vmatprep.subr.mxu0 0.0
  %405 = vmatpush1.xpose.msra.mxu0 0.0
  %406 = vmatprep.subr.mxu0 0.0
  %407 = vmatpush1.xpose.msra.mxu0 0.0
  %408 = vmatprep.subr.mxu0 0.0
  %409 = vmatpush1.xpose.msra.mxu0 0.0
  %410 = vmatprep.subr.mxu0 0.0
  %411 = vmatpush1.xpose.msra.mxu0 0.0
  %412 = vmatprep.subr.mxu0 0.0
  %413 = vmatpush1.xpose.msra.mxu0 0.0
  %414 = vmatprep.subr.mxu0 0.0
  %415 = vmatpush1.xpose.msra.mxu0 0.0
  %416 = vmatprep.subr.mxu0 0.0
  %417 = vmatpush1.xpose.msra.mxu0 0.0
  %418 = vmatprep.subr.mxu0 0.0
  %419 = vmatpush1.xpose.msra.mxu0 0.0
  %420 = vmatprep.subr.mxu0 0.0
  %421 = vmatpush1.xpose.msra.mxu0 0.0
  %422 = vmatprep.subr.mxu0 0.0
  %423 = vmatpush1.xpose.msra.mxu0 0.0
  %424 = vmatprep.subr.mxu0 0.0
  %425 = vmatpush1.xpose.msra.mxu0 0.0
  %426 = vmatprep.subr.mxu0 0.0
  %427 = vmatpush1.xpose.msra.mxu0 0.0
  %428 = vmatprep.subr.mxu0 0.0
  %429 = vmatpush1.xpose.msra.mxu0 0.0
  %430 = vmatprep.subr.mxu0 0.0
  %431 = vmatpush1.xpose.msra.mxu0 0.0
  %432 = vmatprep.subr.mxu0 0.0
  %433 = vmatpush1.xpose.msra.mxu0 0.0
  %434 = vmatprep.mubr.f32.mxu0 0.0
  %435 = vmatmul.mubr.f32.gmra.mrb[0].mxu0 %v366
  %v436 = vpop.f32.mrb[0].mxu0
  %v437 = vadd.f32 0.0, %v436
  %v438 = vpop.f32.mrb[0].mxu0
  %439 = vdwg.mxu0
  %440 = vset.pattern.permute.xlu0 9
  %441 = vperm.xlu0 %440, %v326
  %v442 = vpop.permute.xlu0 %441
  %v444 = vlaneseq
  %v445 = vshrl.u32 %v444, 7
  %v446 = vsub.s32 0, %v445
  %v447 = vrot.slane %v37, %v446
  %v448 = vmul.f32 %v442, %v447
  %449 = vset.pattern.permute.xlu0 10
  %450 = vperm.xlu0 %449, %v326
  %v451 = vpop.permute.xlu0 %450
  %v453 = vlaneseq
  %v454 = vshrl.u32 %v453, 7
  %v455 = vsub.s32 1, %v454
  %v456 = vrot.slane %v37, %v455
  %v457 = vmul.f32 %v451, %v456
  %v458 = vadd.f32 %v448, %v457
  %459 = vset.pattern.permute.xlu0 11
  %460 = vperm.xlu0 %459, %v326
  %v461 = vpop.permute.xlu0 %460
  %v463 = vlaneseq
  %v464 = vshrl.u32 %v463, 7
  %v465 = vsub.s32 2, %v464
  %v466 = vrot.slane %v37, %v465
  %v467 = vmul.f32 %v461, %v466
  %v468 = vadd.f32 %v458, %v467
  %470 = vrot.lane.b32.xlu0 %v468, 125
  %v471 = vpop.permute.xlu0 %470
  %v473 = vsub.f32 %v143, %v471
  %v474 = vsub.f32 0.0, %v322
  %v475 = vadd.f32 %v474, %v205
  %477 = vrot.lane.b32.xlu0 %v473, 125
  %v478 = vpop.permute.xlu0 %477
  %v480 = vadd.f32 %v475, %v478
  %v482 = vmul.f32 %v322, %v364
  %483 = vrot.lane.b32.xlu0 %v326, 6
  %v484 = vpop.permute.xlu0 %483
  %v486 = vmul.f32 %v32, %v484
  %488 = vrot.lane.b32.xlu0 %v437, 6
  %v489 = vpop.permute.xlu0 %488
  %v491 = vadd.f32 %v361, %v489
  %493 = vrot.lane.b32.xlu0 %v491, 9
  %v494 = vpop.permute.xlu0 %493
  %v496 = vmul.f32 %v486, %v494
  %498 = vrot.lane.b32.xlu0 %v496, 113
  %v499 = vpop.permute.xlu0 %498
  %v501 = vadd.f32 %v482, %v499
  %v502 = vtanh.pop %v287
  %v503 = vlaneseq
  %v504 = vshrl.u32 %v503, 7
  %v505 = vsub.s32 0, %v504
  %v506 = vrot.slane %v502, %v505
  %508 = vrot.lane.b32.xlu0 %v506, 122
  %v509 = vpop.permute.xlu0 %508
  %v511 = vadd.f32 %v501, %v509
  %512 = vrot.lane.b32.xlu0 %v326, 9
  %v513 = vpop.permute.xlu0 %512
  %v515 = vmul.f32 %v32, %v513
  %517 = vrot.lane.b32.xlu0 %v480, 18
  %v518 = vpop.permute.xlu0 %517
  %v520 = vmul.f32 %v515, %v518
  %522 = vrot.lane.b32.xlu0 %v520, 3
  %v523 = vpop.permute.xlu0 %522
  %v525 = vmul.f32 %v32, %v523
  %527 = vrot.lane.b32.xlu0 %v525, 107
  %v528 = vpop.permute.xlu0 %527
  %v530 = vadd.f32 %v511, %v528
  %vm531 = vcmask 19456
  %532 = vst.msk [vmem:[%s3] sm:$0xf] %vm531, %v530
  // Predicated region
  $region14: #{_forward_impl.3} parent=0 // pred_check
    _
  $region15: #{_forward_impl.3} parent=0 // pred_check_branch
    %534 = sbr.rel (0) target = $region17
  $region16: #{_forward_impl.3} parent=0 // pred_region
    _
  $region17: #{_forward_impl.3} parent=0 // pred_fallthru
    _
  // Predicated region
  $region18: #{_forward_impl.3} parent=0 // pred_check
    _
  $region19: #{_forward_impl.3} parent=0 // pred_check_branch
    %536 = sbr.rel (0) target = $region21
  $region20: #{_forward_impl.3} parent=0 // pred_region
    _
  $region21: #{_forward_impl.3} parent=0 // pred_fallthru
    _

</llo_original>
